<compile_context>
chip_gen: v7x
topology: tpu7x:2x2x1
jax: 0.10.0
libtpu: 0.0.40
codegen_flags: <defaults>
</compile_context>

<pallas_src>
import functools

import jax
import jax.numpy as jnp
from jax import lax
from jax.experimental import pallas as pl
from jax.experimental.pallas import tpu as pltpu


def _cdiv(a, b):
    return -(-a // b)


def _round_up(a, m):
    return ((a + m - 1) // m) * m


def _const_spec(shape):
    # Constant block index every grid step -> operand stays resident in VMEM.
    ndim = len(shape)
    return pl.BlockSpec(shape, lambda i, _nd=ndim: (0,) * _nd)


def _mlp_kernel(x_ref, w1t_ref, b1_ref, wmid_ref, bmid_ref, wout_ref, bout_ref,
                out_ref, *, n_hidden, dim_input, dim_output, sub_n, matmul_dtype):
    # Feature-major layout: batch*time lives on the 128-lane (last) axis.
    # x_ref:    (dim_input, TILE_N)
    # w1t_ref:  (H, dim_input)          b1_ref:   (H, 1)
    # wmid_ref: (n_hidden, H, H)        bmid_ref: (n_hidden, H, 1)
    # wout_ref: (H, 1) if dim_output==1 else (dim_output, H)
    # bout_ref: (dim_output, 1)
    # out_ref:  (dim_output, TILE_N)
    tile_n = x_ref.shape[-1]
    n_slabs = tile_n // sub_n
    f32 = jnp.float32

    # Hoist weight loads out of the slab loop (a few vregs, reused every slab).
    w1 = w1t_ref[...]
    b1 = b1_ref[...]
    wmid = wmid_ref[...]
    bmid = bmid_ref[...]
    wout = wout_ref[...]
    bout = bout_ref[...]

    def slab_body(k, carry):
        # Register-block the lane axis: the whole layer chain for one sub_n-wide
        # slab stays in vregs (no inter-layer VMEM spill of a huge (H, TILE_N)).
        start = pl.multiple_of(k * sub_n, sub_n)
        xs = x_ref[:, pl.ds(start, sub_n)]                    # (dim_input, sub_n)

        if dim_input == 1:
            # K=1 contraction: VPU broadcast outer product, keep the MXU free.
            pre = w1 * xs + b1
        else:
            pre = jnp.dot(w1.astype(matmul_dtype), xs.astype(matmul_dtype),
                          preferred_element_type=f32) + b1
        h = jnp.tanh(pre)                                     # (H, sub_n) f32

        for i in range(n_hidden):                             # static unroll
            h = jnp.tanh(
                jnp.dot(wmid[i], h.astype(matmul_dtype),
                        preferred_element_type=f32) + bmid[i])

        if dim_output == 1:
            # 1-row projection: VPU multiply + XLU sublane reduce (MXU stays free).
            o = jnp.sum(wout * h, axis=0, keepdims=True) + bout
        else:
            o = jnp.dot(wout.astype(matmul_dtype), h.astype(matmul_dtype),
                        preferred_element_type=f32) + bout

        out_ref[:, pl.ds(start, sub_n)] = o.astype(out_ref.dtype)
        return carry

    if n_slabs == 1:
        slab_body(0, None)
    else:
        lax.fori_loop(0, n_slabs, slab_body, None, unroll=True)


def delta_hedge_nn_forward(S, params, *, n_hidden, hidden_dim, dim_output,
                           max_tile_n=8192, matmul_dtype=jnp.float32):
    """S: (B, T, dim_input) float32. Returns (B, T-1) if dim_output==1
    else (B, T-1, dim_output)."""
    B, T, dim_input = S.shape
    H = hidden_dim
    N = B * (T - 1)

    # (B, T-1, dim_input) -> feature-major (dim_input, N): batch*time on lanes.
    x = S[:, : T - 1, :].reshape(N, dim_input).astype(jnp.float32).T

    # --- Tile selection ---------------------------------------------------
    # Fewest tiles subject to tile_n <= max_tile_n, then rebalance so pad waste
    # stays < 128 columns per tile. Force >= 2 tiles when N is big enough so the
    # "parallel" axis shards across both v7x TensorCores (no-op on v5e/v6e).
    num_tiles = max(_cdiv(N, max_tile_n), 1)
    if num_tiles < 2 and N > 128:
        num_tiles = 2
    tile_n = _round_up(_cdiv(N, num_tiles), 128)
    grid_n = _cdiv(N, tile_n)
    # In-kernel register-block width: largest of {512, 256, 128} dividing tile_n.
    sub_n = 512 if tile_n % 512 == 0 else (256 if tile_n % 256 == 0 else 128)

    # --- Weight layout (column-major MLP: W^T @ x_col) ---------------------
    w1, b1, wmid, bmid, wout, bout = params
    w1t = jnp.asarray(w1, jnp.float32).T                                # (H, dim_input)
    b1c = jnp.asarray(b1, jnp.float32).reshape(H, 1)                    # (H, 1)
    wmidt = jnp.transpose(jnp.asarray(wmid, jnp.float32), (0, 2, 1))    # (n_hidden, H, H)
    wmidt = wmidt.astype(matmul_dtype)                                  # MXU operand dtype
    bmidc = jnp.asarray(bmid, jnp.float32).reshape(n_hidden, H, 1)      # (n_hidden, H, 1)
    if dim_output == 1:
        wout_k = jnp.asarray(wout, jnp.float32).reshape(H, 1)           # column for VPU/XLU path
    else:
        wout_k = jnp.asarray(wout, jnp.float32).T                       # (dim_output, H)
    boutc = jnp.asarray(bout, jnp.float32).reshape(dim_output, 1)       # (dim_output, 1)

    kernel = functools.partial(_mlp_kernel, n_hidden=n_hidden, dim_input=dim_input,
                               dim_output=dim_output, sub_n=sub_n,
                               matmul_dtype=matmul_dtype)

    # Advisory cost hint for XLA scheduling of surrounding ops.
    flops = 2 * N * (dim_input * H + n_hidden * H * H + H * dim_output)
    transcendentals = N * (n_hidden + 1) * H
    weight_bytes = 4 * (H * dim_input + H + n_hidden * H * (H + 1)
                        + H * dim_output + dim_output)
    bytes_accessed = 4 * N * (dim_input + dim_output) + weight_bytes

    out = pl.pallas_call(
        kernel,
        out_shape=jax.ShapeDtypeStruct((dim_output, N), jnp.float32),
        grid=(grid_n,),
        in_specs=[
            pl.BlockSpec((dim_input, tile_n), lambda i: (0, i)),   # x tile (lane-dense)
            _const_spec((H, dim_input)),
            _const_spec((H, 1)),
            _const_spec((n_hidden, H, H)),
            _const_spec((n_hidden, H, 1)),
            _const_spec(tuple(wout_k.shape)),
            _const_spec((dim_output, 1)),
        ],
        out_specs=pl.BlockSpec((dim_output, tile_n), lambda i: (0, i)),
        compiler_params=pltpu.CompilerParams(
            dimension_semantics=("parallel",),   # shards tiles across TCs on v7x
        ),
        cost_estimate=pl.CostEstimate(flops=flops,
                                      transcendentals=transcendentals,
                                      bytes_accessed=bytes_accessed),
    )(x, w1t, b1c, wmidt, bmidc, wout_k, boutc)

    # Reshape back to (B, T-1[, dim_output]) in the wrapper (free layout plumbing).
    out = out.T.reshape(B, T - 1, dim_output)
    if dim_output == 1:
        out = out[..., 0]
    return out


def init_params(key, *, n_hidden, dim_input, dim_output, hidden_dim):
    """Deterministic PyTorch-style uniform(-1/sqrt(fan_in), 1/sqrt(fan_in)) init."""
    ks = jax.random.split(key, 6)

    def unif(k, shape, fan_in):
        bound = 1.0 / jnp.sqrt(jnp.asarray(fan_in, jnp.float32))
        return jax.random.uniform(k, shape, jnp.float32, -bound, bound)

    w1 = unif(ks[0], (dim_input, hidden_dim), dim_input)
    b1 = unif(ks[1], (hidden_dim,), dim_input)
    wmid = unif(ks[2], (n_hidden, hidden_dim, hidden_dim), hidden_dim)
    bmid = unif(ks[3], (n_hidden, hidden_dim), hidden_dim)
    wout = unif(ks[4], (hidden_dim, dim_output), hidden_dim)
    bout = unif(ks[5], (dim_output,), hidden_dim)
    return (w1, b1, wmid, bmid, wout, bout)


def reference_forward(S, params, *, n_hidden, hidden_dim, dim_output):
    """Pure-JAX reference mirroring the torch loop, for sanity checking."""
    w1, b1, wmid, bmid, wout, bout = params
    B, T, _ = S.shape
    hs = []
    for t in range(T - 1):
        h = jnp.tanh(S[:, t, :] @ w1 + b1)
        for i in range(n_hidden):
            h = jnp.tanh(h @ wmid[i] + bmid[i])
        hs.append(h @ wout + bout)
    h = jnp.stack(hs, axis=1)
    if dim_output == 1:
        h = h[..., 0]
    return h


if __name__ == "__main__":
    n_hidden, dim_input, dim_output, hidden_dim = 2, 1, 1, 32

    key = jax.random.PRNGKey(0)
    k_s, k_p, k_s2 = jax.random.split(key, 3)
    params = init_params(k_p, n_hidden=n_hidden, dim_input=dim_input,
                         dim_output=dim_output, hidden_dim=hidden_dim)

    # --- Small config (module defaults): single tile, single sub-slab, f32 ---
    B, T = 2, 8  # sequence length 8 -> output length 7
    S = jax.random.normal(k_s, (B, T, dim_input), dtype=jnp.float32)
    out = delta_hedge_nn_forward(S, params, n_hidden=n_hidden,
                                 hidden_dim=hidden_dim, dim_output=dim_output)
    out = jax.block_until_ready(out)
    ref = reference_forward(S, params, n_hidden=n_hidden,
                            hidden_dim=hidden_dim, dim_output=dim_output)
    assert out.shape == (B, T - 1), out.shape
    assert jnp.allclose(out, ref, atol=1e-5, rtol=1e-5)

    # --- Larger config: 2-tile grid (v7x TC split), unrolled sub-slab loop ---
    B2, T2 = 64, 40  # N = 2496 -> 2 tiles of 1280 cols, 5 x 256-lane slabs each
    S2 = jax.random.normal(k_s2, (B2, T2, dim_input), dtype=jnp.float32)
    ref2 = reference_forward(S2, params, n_hidden=n_hidden,
                             hidden_dim=hidden_dim, dim_output=dim_output)

    out2 = delta_hedge_nn_forward(S2, params, n_hidden=n_hidden,
                                  hidden_dim=hidden_dim, dim_output=dim_output)
    out2 = jax.block_until_ready(out2)
    assert out2.shape == (B2, T2 - 1), out2.shape
    assert jnp.allclose(out2, ref2, atol=1e-5, rtol=1e-5)

    # bf16 MXU-operand path (faster on v6e/v7x; tanh/biases stay f32 for v5e).
    out2_bf16 = delta_hedge_nn_forward(S2, params, n_hidden=n_hidden,
                                       hidden_dim=hidden_dim, dim_output=dim_output,
                                       matmul_dtype=jnp.bfloat16)
    out2_bf16 = jax.block_until_ready(out2_bf16)
    assert jnp.allclose(out2_bf16, ref2, atol=5e-2, rtol=0.0)

    print("KERNEL_OK")
</pallas_src>

<mosaic_0001>
module attributes {stable_mosaic.version = 11 : i64} {
  func.func @_mlp_kernel(%arg0: i32, %arg1: memref<1x128xf32, #tpu.memory_space<vmem>>, %arg2: memref<32x1xf32, #tpu.memory_space<vmem>>, %arg3: memref<32x1xf32, #tpu.memory_space<vmem>>, %arg4: memref<2x32x32xf32, #tpu.memory_space<vmem>>, %arg5: memref<2x32x1xf32, #tpu.memory_space<vmem>>, %arg6: memref<32x1xf32, #tpu.memory_space<vmem>>, %arg7: memref<1x1xf32, #tpu.memory_space<vmem>>, %arg8: memref<1x128xf32, #tpu.memory_space<vmem>>) attributes {dimension_semantics = [#tpu.dimension_semantics<parallel>], iteration_bounds = array<i64: 1>, scalar_prefetch = 0 : i64, scratch_operands = 0 : i64, tpu.core_type = #tpu.core_type<tc>, window_params = [{transform_indices = @transform_0, window_bounds = array<i64: 1, 128>}, {pipeline_mode = #tpu.pipeline_mode<synchronous>, transform_indices = @transform_1, window_bounds = array<i64: 32, 1>}, {pipeline_mode = #tpu.pipeline_mode<synchronous>, transform_indices = @transform_2, window_bounds = array<i64: 32, 1>}, {pipeline_mode = #tpu.pipeline_mode<synchronous>, transform_indices = @transform_3, window_bounds = array<i64: 2, 32, 32>}, {pipeline_mode = #tpu.pipeline_mode<synchronous>, transform_indices = @transform_4, window_bounds = array<i64: 2, 32, 1>}, {pipeline_mode = #tpu.pipeline_mode<synchronous>, transform_indices = @transform_5, window_bounds = array<i64: 32, 1>}, {pipeline_mode = #tpu.pipeline_mode<synchronous>, transform_indices = @transform_6, window_bounds = array<i64: 1, 1>}, {transform_indices = @transform_7, window_bounds = array<i64: 1, 128>}]} {
    %c0 = arith.constant 0 : index
    %c0_0 = arith.constant 0 : index
    %0 = vector.load %arg2[%c0, %c0_0] : memref<32x1xf32, #tpu.memory_space<vmem>>, vector<32x1xf32>
    %c0_1 = arith.constant 0 : index
    %c0_2 = arith.constant 0 : index
    %1 = vector.load %arg3[%c0_1, %c0_2] : memref<32x1xf32, #tpu.memory_space<vmem>>, vector<32x1xf32>
    %c0_3 = arith.constant 0 : index
    %c0_4 = arith.constant 0 : index
    %c0_5 = arith.constant 0 : index
    %2 = vector.load %arg4[%c0_3, %c0_4, %c0_5] : memref<2x32x32xf32, #tpu.memory_space<vmem>>, vector<2x32x32xf32>
    %c0_6 = arith.constant 0 : index
    %c0_7 = arith.constant 0 : index
    %c0_8 = arith.constant 0 : index
    %3 = vector.load %arg5[%c0_6, %c0_7, %c0_8] : memref<2x32x1xf32, #tpu.memory_space<vmem>>, vector<2x32x1xf32>
    %c0_9 = arith.constant 0 : index
    %c0_10 = arith.constant 0 : index
    %4 = vector.load %arg6[%c0_9, %c0_10] : memref<32x1xf32, #tpu.memory_space<vmem>>, vector<32x1xf32>
    %c0_11 = arith.constant 0 : index
    %c0_12 = arith.constant 0 : index
    %5 = vector.load %arg7[%c0_11, %c0_12] : memref<1x1xf32, #tpu.memory_space<vmem>>, vector<1x1xf32>
    %c0_i32 = arith.constant 0 : i32
    %6 = tpu.assume_multiple %c0_i32, 128 : i32
    %c0_13 = arith.constant 0 : index
    %7 = arith.index_cast %6 : i32 to index
    %8 = vector.load %arg1[%c0_13, %7] : memref<1x128xf32, #tpu.memory_space<vmem>>, vector<1x128xf32>
    %9 = vector.broadcast %0 : vector<32x1xf32> to vector<32x128xf32>
    %10 = vector.broadcast %8 : vector<1x128xf32> to vector<32x128xf32>
    %11 = arith.mulf %9, %10 : vector<32x128xf32>
    %12 = vector.broadcast %1 : vector<32x1xf32> to vector<32x128xf32>
    %13 = arith.addf %11, %12 : vector<32x128xf32>
    %14 = math.tanh %13 : vector<32x128xf32>
    %15 = vector.extract_strided_slice %2 {offsets = [0, 0, 0], sizes = [1, 32, 32], strides = [1, 1, 1]} : vector<2x32x32xf32> to vector<1x32x32xf32>
    %16 = vector.shape_cast %15 : vector<1x32x32xf32> to vector<32x32xf32>
    %cst = arith.constant dense<0.000000e+00> : vector<32x128xf32>
    %17 = tpu.matmul %16, %14, %cst {dimension_numbers = #tpu.dot_dimension_numbers<[1], [0], [0], [1], [0, 0, 1, 1], [], []>} : vector<32x32xf32>, vector<32x128xf32>, vector<32x128xf32> -> vector<32x128xf32>
    %18 = vector.extract_strided_slice %3 {offsets = [0, 0, 0], sizes = [1, 32, 1], strides = [1, 1, 1]} : vector<2x32x1xf32> to vector<1x32x1xf32>
    %19 = vector.shape_cast %18 : vector<1x32x1xf32> to vector<32x1xf32>
    %20 = vector.broadcast %19 : vector<32x1xf32> to vector<32x128xf32>
    %21 = arith.addf %17, %20 : vector<32x128xf32>
    %22 = math.tanh %21 : vector<32x128xf32>
    %23 = vector.extract_strided_slice %2 {offsets = [1, 0, 0], sizes = [1, 32, 32], strides = [1, 1, 1]} : vector<2x32x32xf32> to vector<1x32x32xf32>
    %24 = vector.shape_cast %23 : vector<1x32x32xf32> to vector<32x32xf32>
    %cst_14 = arith.constant dense<0.000000e+00> : vector<32x128xf32>
    %25 = tpu.matmul %24, %22, %cst_14 {dimension_numbers = #tpu.dot_dimension_numbers<[1], [0], [0], [1], [0, 0, 1, 1], [], []>} : vector<32x32xf32>, vector<32x128xf32>, vector<32x128xf32> -> vector<32x128xf32>
    %26 = vector.extract_strided_slice %3 {offsets = [1, 0, 0], sizes = [1, 32, 1], strides = [1, 1, 1]} : vector<2x32x1xf32> to vector<1x32x1xf32>
    %27 = vector.shape_cast %26 : vector<1x32x1xf32> to vector<32x1xf32>
    %28 = vector.broadcast %27 : vector<32x1xf32> to vector<32x128xf32>
    %29 = arith.addf %25, %28 : vector<32x128xf32>
    %30 = math.tanh %29 : vector<32x128xf32>
    %31 = vector.broadcast %4 : vector<32x1xf32> to vector<32x128xf32>
    %32 = arith.mulf %31, %30 : vector<32x128xf32>
    %cst_15 = arith.constant dense<0.000000e+00> : vector<128xf32>
    %33 = vector.multi_reduction <add>, %32, %cst_15 [0] : vector<32x128xf32> to vector<128xf32>
    %34 = vector.shape_cast %33 : vector<128xf32> to vector<1x128xf32>
    %35 = vector.broadcast %5 : vector<1x1xf32> to vector<1x128xf32>
    %36 = arith.addf %34, %35 : vector<1x128xf32>
    %c0_16 = arith.constant 0 : index
    %37 = arith.index_cast %6 : i32 to index
    %38 = vector.load %arg8[%c0_16, %37] : memref<1x128xf32, #tpu.memory_space<vmem>>, vector<1x128xf32>
    tpu.vector_store %arg8[%c0_16, %37], %36 {strides = array<i32>} : memref<1x128xf32, #tpu.memory_space<vmem>>, vector<1x128xf32>,
    return
  }
  func.func @transform_0(%arg0: i32) -> (i32, i32) {
    %c0_i32 = arith.constant 0 : i32
    %c0_i32_0 = arith.constant 0 : i32
    return %c0_i32, %arg0 : i32, i32
  }
  func.func @transform_1(%arg0: i32) -> (i32, i32) {
    %c0_i32 = arith.constant 0 : i32
    %c0_i32_0 = arith.constant 0 : i32
    %c0_i32_1 = arith.constant 0 : i32
    return %c0_i32, %c0_i32_0 : i32, i32
  }
  func.func @transform_2(%arg0: i32) -> (i32, i32) {
    %c0_i32 = arith.constant 0 : i32
    %c0_i32_0 = arith.constant 0 : i32
    %c0_i32_1 = arith.constant 0 : i32
    return %c0_i32, %c0_i32_0 : i32, i32
  }
  func.func @transform_3(%arg0: i32) -> (i32, i32, i32) {
    %c0_i32 = arith.constant 0 : i32
    %c0_i32_0 = arith.constant 0 : i32
    %c0_i32_1 = arith.constant 0 : i32
    %c0_i32_2 = arith.constant 0 : i32
    return %c0_i32, %c0_i32_0, %c0_i32_1 : i32, i32, i32
  }
  func.func @transform_4(%arg0: i32) -> (i32, i32, i32) {
    %c0_i32 = arith.constant 0 : i32
    %c0_i32_0 = arith.constant 0 : i32
    %c0_i32_1 = arith.constant 0 : i32
    %c0_i32_2 = arith.constant 0 : i32
    return %c0_i32, %c0_i32_0, %c0_i32_1 : i32, i32, i32
  }
  func.func @transform_5(%arg0: i32) -> (i32, i32) {
    %c0_i32 = arith.constant 0 : i32
    %c0_i32_0 = arith.constant 0 : i32
    %c0_i32_1 = arith.constant 0 : i32
    return %c0_i32, %c0_i32_0 : i32, i32
  }
  func.func @transform_6(%arg0: i32) -> (i32, i32) {
    %c0_i32 = arith.constant 0 : i32
    %c0_i32_0 = arith.constant 0 : i32
    %c0_i32_1 = arith.constant 0 : i32
    return %c0_i32, %c0_i32_0 : i32, i32
  }
  func.func @transform_7(%arg0: i32) -> (i32, i32) {
    %c0_i32 = arith.constant 0 : i32
    %c0_i32_0 = arith.constant 0 : i32
    return %c0_i32, %arg0 : i32, i32
  }
}

</mosaic_0001>

<llo_original>
// kernel: tpu_custom_call.1
$region0: #{tpu_custom_call.1}
  #allocation0 [shape = 'u32[]', space=smem, size = 0x4, offset = 0x4, fixed_abs, tag = 'smem constant byte address 0x4 - core index']
  #allocation1 [shape = 'u32[144,128]{1,0:T(1,128)}', space=vmem, size = 0x12000, scoped, tag = 'internal scratch']
  #allocation2 [shape = 'f32[1,1]{1,0:T(1,128)S(1)}', space=vmem, size = 0x200, scoped, tag = 'scoped memory for tpu_custom_call.1']
  %s0 = inlined_call_operand.vmem [shape: f32[1,14], index: 0, kind: input, shape index: {}]
  %s1 = inlined_call_operand.vmem [shape: f32[32,1], index: 1, kind: input, shape index: {}]
  %s2 = inlined_call_operand.vmem [shape: f32[32,1], index: 2, kind: input, shape index: {}]
  %s3 = inlined_call_operand.vmem [shape: f32[2,32,32], index: 3, kind: input, shape index: {}]
  %s4 = inlined_call_operand.vmem [shape: f32[2,32,1], index: 4, kind: input, shape index: {}]
  %s5 = inlined_call_operand.vmem [shape: f32[32,1], index: 5, kind: input, shape index: {}]
  %s6 = inlined_call_operand.<no memory space> [shape: f32[1,1], index: 6, kind: input, shape index: {}]
  %s7 = inlined_call_operand.hbm [shape: f32[1,14], index: 7, kind: output, shape index: {}]
  %s8 = sld [smem:[#allocation0]]
  $region38: #{tpu_custom_call.1} parent=0
    _
  %s10 = ssub.s32 1, %s8
  %s11 = scalar_select 0, %s10, %s8
  %v12 = vstv %s6
  %13 = vst [vmem:[#allocation2] sm:$0x1] %v12
  $region1: #{tpu_custom_call.1} parent=0
    #allocation3 [shape = 'u8[512]{0}', space=vmem, size = 0x400, scoped, tag = 'output window, operand 0, single buffered']
    #allocation4 [shape = 's32[1]{0}', space=sflag, size = 0x4, scoped, tag = 'scoped memory for tpu_custom_call.1']
    %14 = vsyncpa [#allocation4], 0
    // Predicated region
    $region2: #{tpu_custom_call.1} parent=1 // pred_check
      _
    $region3: #{tpu_custom_call.1} parent=1 // pred_check_branch
      %16 = sbr.rel (0) target = $region5
    $region4: #{tpu_custom_call.1} parent=1 // pred_region
      _
    $region5: #{tpu_custom_call.1} parent=1 // pred_fallthru
      _
    // Predicated region
    $region6: #{tpu_custom_call.1} parent=1 // pred_check
      _
    $region7: #{tpu_custom_call.1} parent=1 // pred_check_branch
      %18 = sbr.rel (0) target = $region9
    $region8: #{tpu_custom_call.1} parent=1 // pred_region
      _
    $region9: #{tpu_custom_call.1} parent=1 // pred_fallthru
      _
    // Predicated region
    $region10: #{tpu_custom_call.1} parent=1 // pred_check
      _
    $region11: #{tpu_custom_call.1} parent=1 // pred_check_branch
      %20 = sbr.rel (0) target = $region13
    $region12: #{tpu_custom_call.1} parent=1 // pred_region
      _
    $region13: #{tpu_custom_call.1} parent=1 // pred_fallthru
      _
    // Predicated region
    $region14: #{tpu_custom_call.1} parent=1 // pred_check
      _
    $region15: #{tpu_custom_call.1} parent=1 // pred_check_branch
      %22 = sbr.rel (0) target = $region17
    $region16: #{tpu_custom_call.1} parent=1 // pred_region
      _
    $region17: #{tpu_custom_call.1} parent=1 // pred_fallthru
      _
    // Predicated region
    $region18: #{tpu_custom_call.1} parent=1 // pred_check
      _
    $region19: #{tpu_custom_call.1} parent=1 // pred_check_branch
      %24 = sbr.rel (0) target = $region21
    $region20: #{tpu_custom_call.1} parent=1 // pred_region
      _
    $region21: #{tpu_custom_call.1} parent=1 // pred_fallthru
      _
    // Predicated region
    $region22: #{tpu_custom_call.1} parent=1 // pred_check
      _
    $region23: #{tpu_custom_call.1} parent=1 // pred_check_branch
      %26 = sbr.rel (0) target = $region25
    $region24: #{tpu_custom_call.1} parent=1 // pred_region
      _
    $region25: #{tpu_custom_call.1} parent=1 // pred_fallthru
      _
    // Predicated region
    $region26: #{tpu_custom_call.1} parent=1 // pred_check
      _
    $region27: #{tpu_custom_call.1} parent=1 // pred_check_branch
      %28 = sbr.rel (0) target = $region29
    $region28: #{tpu_custom_call.1} parent=1 // pred_region
      _
    $region29: #{tpu_custom_call.1} parent=1 // pred_fallthru
      _
    %v29 = vld [vmem:[%s1] sm:$0xff]
    %v30 = vld [vmem:[%s1 + $0x8] sm:$0xff]
    %v31 = vld [vmem:[%s1 + $0x10] sm:$0xff]
    %v32 = vld [vmem:[%s1 + $0x18] sm:$0xff]
    %v33 = vld [vmem:[%s2] sm:$0xff]
    %v34 = vld [vmem:[%s2 + $0x8] sm:$0xff]
    %v35 = vld [vmem:[%s2 + $0x10] sm:$0xff]
    %v36 = vld [vmem:[%s2 + $0x18] sm:$0xff]
    %v37 = vld [vmem:[%s3] sm:$0xff]
    %v38 = vld [vmem:[%s3 + $0x8] sm:$0xff]
    %v39 = vld [vmem:[%s3 + $0x10] sm:$0xff]
    %v40 = vld [vmem:[%s3 + $0x18] sm:$0xff]
    %v41 = vld [vmem:[%s3 + $0x20] sm:$0xff]
    %v42 = vld [vmem:[%s3 + $0x28] sm:$0xff]
    %v43 = vld [vmem:[%s3 + $0x30] sm:$0xff]
    %v44 = vld [vmem:[%s3 + $0x38] sm:$0xff]
    %v45 = vld [vmem:[%s4] sm:$0xff]
    %v46 = vld [vmem:[%s4 + $0x8] sm:$0xff]
    %v47 = vld [vmem:[%s4 + $0x10] sm:$0xff]
    %v48 = vld [vmem:[%s4 + $0x18] sm:$0xff]
    %v49 = vld [vmem:[%s4 + $0x20] sm:$0xff]
    %v50 = vld [vmem:[%s4 + $0x28] sm:$0xff]
    %v51 = vld [vmem:[%s4 + $0x30] sm:$0xff]
    %v52 = vld [vmem:[%s4 + $0x38] sm:$0xff]
    %v53 = vld [vmem:[%s5] sm:$0xff]
    %v54 = vld [vmem:[%s5 + $0x8] sm:$0xff]
    %v55 = vld [vmem:[%s5 + $0x10] sm:$0xff]
    %v56 = vld [vmem:[%s5 + $0x18] sm:$0xff]
    %v57 = vld [vmem:[#allocation2] sm:$0x1]
    %v58 = vld [vmem:[%s0] sm:$0x1]
    %60 = vset.pattern.permute.xlu0 0
    %61 = vperm.xlu0 %60, %v29
    %v62 = vpop.permute.xlu0 %61
    %65 = vset.pattern.permute.xlu0 0
    %66 = vperm.xlu0 %65, %v30
    %v67 = vpop.permute.xlu0 %66
    %70 = vset.pattern.permute.xlu0 0
    %71 = vperm.xlu0 %70, %v31
    %v72 = vpop.permute.xlu0 %71
    %75 = vset.pattern.permute.xlu0 0
    %76 = vperm.xlu0 %75, %v32
    %v77 = vpop.permute.xlu0 %76
    %v80 = vlaneseq
    %v81 = vshrl.u32 %v80, 7
    %v82 = vsub.s32 0, %v81
    %v83 = vrot.slane %v58, %v82
    %v85 = vmul.f32 %v62, %v83
    %v86 = vmul.f32 %v67, %v83
    %v87 = vmul.f32 %v72, %v83
    %v88 = vmul.f32 %v77, %v83
    %90 = vset.pattern.permute.xlu0 0
    %91 = vperm.xlu0 %90, %v33
    %v92 = vpop.permute.xlu0 %91
    %95 = vset.pattern.permute.xlu0 0
    %96 = vperm.xlu0 %95, %v34
    %v97 = vpop.permute.xlu0 %96
    %100 = vset.pattern.permute.xlu0 0
    %101 = vperm.xlu0 %100, %v35
    %v102 = vpop.permute.xlu0 %101
    %105 = vset.pattern.permute.xlu0 0
    %106 = vperm.xlu0 %105, %v36
    %v107 = vpop.permute.xlu0 %106
    %v109 = vadd.f32 %v85, %v92
    %v110 = vadd.f32 %v86, %v97
    %v111 = vadd.f32 %v87, %v102
    %v112 = vadd.f32 %v88, %v107
    %v113 = vtanh.pop %v109
    %v114 = vtanh.pop %v110
    %v115 = vtanh.pop %v111
    %v116 = vtanh.pop %v112
    %118 = vset.pattern.permute.xlu0 0
    %119 = vperm.xlu0 %118, %v45
    %v120 = vpop.permute.xlu0 %119
    %123 = vset.pattern.permute.xlu0 0
    %124 = vperm.xlu0 %123, %v46
    %v125 = vpop.permute.xlu0 %124
    %128 = vset.pattern.permute.xlu0 0
    %129 = vperm.xlu0 %128, %v47
    %v130 = vpop.permute.xlu0 %129
    %133 = vset.pattern.permute.xlu0 0
    %134 = vperm.xlu0 %133, %v48
    %v135 = vpop.permute.xlu0 %134
    %vm137 = vcmask 261120
    %v139 = vsel %vm137, %v37, 0
    %v142 = vsel %vm137, %v38, 0
    %v145 = vsel %vm137, %v39, 0
    %v148 = vsel %vm137, %v40, 0
    %150 = vmatprep.subr.mxu0 0.0
    %151 = vmatpush1.msra.mxu0 %v113
    %152 = vmatprep.subr.mxu0 0.0
    %153 = vmatpush1.msra.mxu0 %v114
    %154 = vmatprep.subr.mxu0 0.0
    %155 = vmatpush1.msra.mxu0 %v115
    %156 = vmatprep.subr.mxu0 0.0
    %157 = vmatpush1.msra.mxu0 %v116
    %158 = vmatprep.subr.mxu0 0.0
    %159 = vmatpush1.msra.mxu0 0.0
    %160 = vmatprep.subr.mxu0 0.0
    %161 = vmatpush1.msra.mxu0 0.0
    %162 = vmatprep.subr.mxu0 0.0
    %163 = vmatpush1.msra.mxu0 0.0
    %164 = vmatprep.subr.mxu0 0.0
    %165 = vmatpush1.msra.mxu0 0.0
    %166 = vmatprep.subr.mxu0 0.0
    %167 = vmatpush1.msra.mxu0 0.0
    %168 = vmatprep.subr.mxu0 0.0
    %169 = vmatpush1.msra.mxu0 0.0
    %170 = vmatprep.subr.mxu0 0.0
    %171 = vmatpush1.msra.mxu0 0.0
    %172 = vmatprep.subr.mxu0 0.0
    %173 = vmatpush1.msra.mxu0 0.0
    %174 = vmatprep.subr.mxu0 0.0
    %175 = vmatpush1.msra.mxu0 0.0
    %176 = vmatprep.subr.mxu0 0.0
    %177 = vmatpush1.msra.mxu0 0.0
    %178 = vmatprep.subr.mxu0 0.0
    %179 = vmatpush1.msra.mxu0 0.0
    %180 = vmatprep.subr.mxu0 0.0
    %181 = vmatpush1.msra.mxu0 0.0
    %182 = vmatprep.subr.mxu0 0.0
    %183 = vmatpush1.msra.mxu0 0.0
    %184 = vmatprep.subr.mxu0 0.0
    %185 = vmatpush1.msra.mxu0 0.0
    %186 = vmatprep.subr.mxu0 0.0
    %187 = vmatpush1.msra.mxu0 0.0
    %188 = vmatprep.subr.mxu0 0.0
    %189 = vmatpush1.msra.mxu0 0.0
    %190 = vmatprep.subr.mxu0 0.0
    %191 = vmatpush1.msra.mxu0 0.0
    %192 = vmatprep.subr.mxu0 0.0
    %193 = vmatpush1.msra.mxu0 0.0
    %194 = vmatprep.subr.mxu0 0.0
    %195 = vmatpush1.msra.mxu0 0.0
    %196 = vmatprep.subr.mxu0 0.0
    %197 = vmatpush1.msra.mxu0 0.0
    %198 = vmatprep.subr.mxu0 0.0
    %199 = vmatpush1.msra.mxu0 0.0
    %200 = vmatprep.subr.mxu0 0.0
    %201 = vmatpush1.msra.mxu0 0.0
    %202 = vmatprep.subr.mxu0 0.0
    %203 = vmatpush1.msra.mxu0 0.0
    %204 = vmatprep.subr.mxu0 0.0
    %205 = vmatpush1.msra.mxu0 0.0
    %206 = vmatprep.subr.mxu0 0.0
    %207 = vmatpush1.msra.mxu0 0.0
    %208 = vmatprep.subr.mxu0 0.0
    %209 = vmatpush1.msra.mxu0 0.0
    %210 = vmatprep.subr.mxu0 0.0
    %211 = vmatpush1.msra.mxu0 0.0
    %212 = vmatprep.subr.mxu0 0.0
    %213 = vmatpush1.msra.mxu0 0.0
    %214 = vmatprep.mubr.f32.mxu0 0.0
    %215 = vmatmul.mubr.f32.gmra.mrb[0].mxu0 %v139
    %v216 = vpop.f32.mrb[0].mxu0
    %v217 = vadd.f32 %v120, %v216
    %v218 = vpop.f32.mrb[0].mxu0
    %219 = vmatprep.mubr.f32.mxu0 0.0
    %220 = vmatmul.mubr.f32.gmra.mrb[0].mxu0 %v142
    %v221 = vpop.f32.mrb[0].mxu0
    %v222 = vadd.f32 %v125, %v221
    %v223 = vpop.f32.mrb[0].mxu0
    %224 = vmatprep.mubr.f32.mxu0 0.0
    %225 = vmatmul.mubr.f32.gmra.mrb[0].mxu0 %v145
    %v226 = vpop.f32.mrb[0].mxu0
    %v227 = vadd.f32 %v130, %v226
    %v228 = vpop.f32.mrb[0].mxu0
    %229 = vmatprep.mubr.f32.mxu0 0.0
    %230 = vmatmul.mubr.f32.gmra.mrb[0].mxu0 %v148
    %v231 = vpop.f32.mrb[0].mxu0
    %v232 = vadd.f32 %v135, %v231
    %v233 = vpop.f32.mrb[0].mxu0
    %234 = vdwg.mxu0
    %v235 = vtanh.pop %v217
    %v236 = vtanh.pop %v222
    %v237 = vtanh.pop %v227
    %v238 = vtanh.pop %v232
    %240 = vset.pattern.permute.xlu0 0
    %241 = vperm.xlu0 %240, %v49
    %v242 = vpop.permute.xlu0 %241
    %245 = vset.pattern.permute.xlu0 0
    %246 = vperm.xlu0 %245, %v50
    %v247 = vpop.permute.xlu0 %246
    %250 = vset.pattern.permute.xlu0 0
    %251 = vperm.xlu0 %250, %v51
    %v252 = vpop.permute.xlu0 %251
    %255 = vset.pattern.permute.xlu0 0
    %256 = vperm.xlu0 %255, %v52
    %v257 = vpop.permute.xlu0 %256
    %v260 = vsel %vm137, %v41, 0
    %v263 = vsel %vm137, %v42, 0
    %v266 = vsel %vm137, %v43, 0
    %v269 = vsel %vm137, %v44, 0
    %271 = vmatprep.subr.mxu0 0.0
    %272 = vmatpush1.msra.mxu0 %v235
    %273 = vmatprep.subr.mxu0 0.0
    %274 = vmatpush1.msra.mxu0 %v236
    %275 = vmatprep.subr.mxu0 0.0
    %276 = vmatpush1.msra.mxu0 %v237
    %277 = vmatprep.subr.mxu0 0.0
    %278 = vmatpush1.msra.mxu0 %v238
    %279 = vmatprep.subr.mxu0 0.0
    %280 = vmatpush1.msra.mxu0 0.0
    %281 = vmatprep.subr.mxu0 0.0
    %282 = vmatpush1.msra.mxu0 0.0
    %283 = vmatprep.subr.mxu0 0.0
    %284 = vmatpush1.msra.mxu0 0.0
    %285 = vmatprep.subr.mxu0 0.0
    %286 = vmatpush1.msra.mxu0 0.0
    %287 = vmatprep.subr.mxu0 0.0
    %288 = vmatpush1.msra.mxu0 0.0
    %289 = vmatprep.subr.mxu0 0.0
    %290 = vmatpush1.msra.mxu0 0.0
    %291 = vmatprep.subr.mxu0 0.0
    %292 = vmatpush1.msra.mxu0 0.0
    %293 = vmatprep.subr.mxu0 0.0
    %294 = vmatpush1.msra.mxu0 0.0
    %295 = vmatprep.subr.mxu0 0.0
    %296 = vmatpush1.msra.mxu0 0.0
    %297 = vmatprep.subr.mxu0 0.0
    %298 = vmatpush1.msra.mxu0 0.0
    %299 = vmatprep.subr.mxu0 0.0
    %300 = vmatpush1.msra.mxu0 0.0
    %301 = vmatprep.subr.mxu0 0.0
    %302 = vmatpush1.msra.mxu0 0.0
    %303 = vmatprep.subr.mxu0 0.0
    %304 = vmatpush1.msra.mxu0 0.0
    %305 = vmatprep.subr.mxu0 0.0
    %306 = vmatpush1.msra.mxu0 0.0
    %307 = vmatprep.subr.mxu0 0.0
    %308 = vmatpush1.msra.mxu0 0.0
    %309 = vmatprep.subr.mxu0 0.0
    %310 = vmatpush1.msra.mxu0 0.0
    %311 = vmatprep.subr.mxu0 0.0
    %312 = vmatpush1.msra.mxu0 0.0
    %313 = vmatprep.subr.mxu0 0.0
    %314 = vmatpush1.msra.mxu0 0.0
    %315 = vmatprep.subr.mxu0 0.0
    %316 = vmatpush1.msra.mxu0 0.0
    %317 = vmatprep.subr.mxu0 0.0
    %318 = vmatpush1.msra.mxu0 0.0
    %319 = vmatprep.subr.mxu0 0.0
    %320 = vmatpush1.msra.mxu0 0.0
    %321 = vmatprep.subr.mxu0 0.0
    %322 = vmatpush1.msra.mxu0 0.0
    %323 = vmatprep.subr.mxu0 0.0
    %324 = vmatpush1.msra.mxu0 0.0
    %325 = vmatprep.subr.mxu0 0.0
    %326 = vmatpush1.msra.mxu0 0.0
    %327 = vmatprep.subr.mxu0 0.0
    %328 = vmatpush1.msra.mxu0 0.0
    %329 = vmatprep.subr.mxu0 0.0
    %330 = vmatpush1.msra.mxu0 0.0
    %331 = vmatprep.subr.mxu0 0.0
    %332 = vmatpush1.msra.mxu0 0.0
    %333 = vmatprep.subr.mxu0 0.0
    %334 = vmatpush1.msra.mxu0 0.0
    %335 = vmatprep.mubr.f32.mxu0 0.0
    %336 = vmatmul.mubr.f32.gmra.mrb[0].mxu0 %v260
    %v337 = vpop.f32.mrb[0].mxu0
    %v338 = vadd.f32 %v242, %v337
    %v339 = vpop.f32.mrb[0].mxu0
    %340 = vmatprep.mubr.f32.mxu0 0.0
    %341 = vmatmul.mubr.f32.gmra.mrb[0].mxu0 %v263
    %v342 = vpop.f32.mrb[0].mxu0
    %v343 = vadd.f32 %v247, %v342
    %v344 = vpop.f32.mrb[0].mxu0
    %345 = vmatprep.mubr.f32.mxu0 0.0
    %346 = vmatmul.mubr.f32.gmra.mrb[0].mxu0 %v266
    %v347 = vpop.f32.mrb[0].mxu0
    %v348 = vadd.f32 %v252, %v347
    %v349 = vpop.f32.mrb[0].mxu0
    %350 = vmatprep.mubr.f32.mxu0 0.0
    %351 = vmatmul.mubr.f32.gmra.mrb[0].mxu0 %v269
    %v352 = vpop.f32.mrb[0].mxu0
    %v353 = vadd.f32 %v257, %v352
    %v354 = vpop.f32.mrb[0].mxu0
    %355 = vdwg.mxu0
    %v356 = vtanh.pop %v338
    %v357 = vtanh.pop %v343
    %v358 = vtanh.pop %v348
    %v359 = vtanh.pop %v353
    %361 = vset.pattern.permute.xlu0 0
    %362 = vperm.xlu0 %361, %v53
    %v363 = vpop.permute.xlu0 %362
    %366 = vset.pattern.permute.xlu0 0
    %367 = vperm.xlu0 %366, %v54
    %v368 = vpop.permute.xlu0 %367
    %371 = vset.pattern.permute.xlu0 0
    %372 = vperm.xlu0 %371, %v55
    %v373 = vpop.permute.xlu0 %372
    %376 = vset.pattern.permute.xlu0 0
    %377 = vperm.xlu0 %376, %v56
    %v378 = vpop.permute.xlu0 %377
    %v380 = vmul.f32 %v363, %v356
    %v381 = vmul.f32 %v368, %v357
    %v382 = vmul.f32 %v373, %v358
    %v383 = vmul.f32 %v378, %v359
    %v384 = vadd.f32 %v380, %v381
    %v385 = vadd.f32 %v384, %v382
    %v386 = vadd.f32 %v385, %v383
    %v387 = vrot.slane %v386, 4
    %v388 = vadd.f32 %v386, %v387
    %v389 = vrot.slane %v388, 2
    %v390 = vadd.f32 %v388, %v389
    %v391 = vrot.slane %v390, 1
    %v392 = vadd.f32 %v390, %v391
    %394 = vset.pattern.permute.xlu0 0
    %395 = vperm.xlu0 %394, %v57
    %v396 = vpop.permute.xlu0 %395
    %v398 = vlaneseq
    %v399 = vshrl.u32 %v398, 7
    %v400 = vsub.s32 0, %v399
    %v401 = vrot.slane %v396, %v400
    %v402 = vadd.f32 %v392, %v401
    %403 = vst [vmem:[#allocation3] sm:$0x1] %v402
    // Predicated region
    $region30: #{tpu_custom_call.1} parent=1 // pred_check
      _
    $region31: #{tpu_custom_call.1} parent=1 // pred_check_branch
      %405 = sbr.rel (0) target = $region33
    $region32: #{tpu_custom_call.1} parent=1 // pred_region
      %s407 = ssub.s32 16, 16
      %408 = vsyncadd [#allocation4], %s407
      %s410 = sshll.u32 [#allocation3], 4
      %s411 = int_to_ptr.vmem [resolvable:$true] %s410
      %413 = dma.vmem_to_hbm [thread:$0]  %s411, 16, %s7, [#allocation4]
    $region33: #{tpu_custom_call.1} parent=1 // pred_fallthru
      _
    // Predicated region
    $region34: #{tpu_custom_call.1} parent=1 // pred_check
      _
    $region35: #{tpu_custom_call.1} parent=1 // pred_check_branch
      %415 = sbr.rel (0) target = $region37
    $region36: #{tpu_custom_call.1} parent=1 // pred_region
      %416 = dma.done [#allocation4], 16
    $region37: #{tpu_custom_call.1} parent=1 // pred_fallthru
      _
    %417 = vsyncpa [#allocation4], 1

</llo_original>
